<compile_context>
chip_gen: v7x
topology: tpu7x:2x2x1
jax: 0.10.0
libtpu: 0.0.40
codegen_flags: <defaults>
</compile_context>

<pallas_src>
import numpy as np
import jax
import jax.numpy as jnp
from jax.experimental import pallas as pl
from jax.experimental.pallas import tpu as pltpu


def _upconv_kernel(x_ref, t_ref, b_ref, o_ref):
    """Fused nearest-2x-upsample + 3x3 conv (padding=1) for B images.

    x_ref: (B, H+2, W*C)      original images, zero-padded by 1 row top/bottom,
                              NHWC with (W, C) flattened into lanes.
    t_ref: (2, W*C, 2*Wu*C)   banded weight slabs:
                              t_ref[0] = [T_even_top | T_odd_bot]   (edge rows)
                              t_ref[1] = [T_even_mid | T_odd_mid]   (shared row)
    b_ref: (1, 2*Wu*C)        bias replicated across output columns,
                              [bias_even | bias_odd].
    o_ref: (B, 2, H, Wu*C)    output rows split by row phase:
                              o[b, p, i, co*C + c] = conv(up(x_b))[2*i + p, co, c]
    """
    B, Hp, Wk = x_ref.shape
    H = Hp - 2
    Wo = o_ref.shape[3]                       # Wu*C (lane-dense, 128 here)

    # Three row-shifted views, flattened to a single M = B*H matmul dimension.
    # (B, H, Wk) -> (B*H, Wk) is a leading-dim collapse (H multiple of 8).
    xs0 = x_ref[:, 0:H, :].reshape(B * H, Wk)        # padded rows i
    xs1 = x_ref[:, 1:H + 1, :].reshape(B * H, Wk)    # padded rows i+1 (shared)
    xs2 = x_ref[:, 2:H + 2, :].reshape(B * H, Wk)    # padded rows i+2

    # Merged middle matmul: N = 2*Wu*C = 256 lanes, bias folded in once.
    mid = (jnp.dot(xs1, t_ref[1], preferred_element_type=jnp.float32)
           + b_ref[...].astype(jnp.float32))          # (B*H, 2*Wo)

    even = (jnp.dot(xs0, t_ref[0, :, :Wo], preferred_element_type=jnp.float32)
            + mid[:, :Wo])                            # (B*H, Wo)
    odd = (mid[:, Wo:]
           + jnp.dot(xs2, t_ref[0, :, Wo:], preferred_element_type=jnp.float32))

    # Lane-dense (Wo-wide) unmasked stores.
    o_ref[:, 0] = even.reshape(B, H, Wo).astype(o_ref.dtype)
    o_ref[:, 1] = odd.reshape(B, H, Wo).astype(o_ref.dtype)


def _build_weight_slabs(w_oihw, W, compute_dtype):
    """Fold nearest-2x upsample + conv zero pad + 3x3 taps into 2 matmul slabs.

    For output column co and horizontal tap kx, the contribution comes from
    original column ci = (co + kx - 1) // 2 when 0 <= ci < W; out-of-range
    taps are the conv zero pad and simply get no entry (no W padding needed).
    Vertical taps fold per output-row phase:
      even rows (2i):   ky=0 @ padded row i,      ky=1 + ky=2 @ padded row i+1
      odd  rows (2i+1): ky=0 + ky=1 @ padded row i+1,     ky=2 @ padded row i+2
    Returns (2, W*C, 2*Wu*C):
      [0] = [T_even_top | T_odd_bot], [1] = [T_even_mid | T_odd_mid].
    Size is O((W*C)^2): intended for the small-C/small-W decoder regime.
    """
    C = w_oihw.shape[0]
    Wu = 2 * W
    w_hwio = jnp.transpose(w_oihw, (2, 3, 1, 0)).astype(jnp.float32)  # (ky,kx,Cin,Cout)

    # Static 0/1 column-selection tensor S[kx, ci, co] (real columns only).
    S = np.zeros((3, W, Wu), np.float32)
    for kx in range(3):
        for co in range(Wu):
            ci = (co + kx - 1) // 2
            if 0 <= ci < W:
                S[kx, ci, co] = 1.0

    # T[ky, ci*C + cin, co*C + cout] = sum_kx S[kx,ci,co] * w[ky,kx,cin,cout]
    T = jnp.einsum("xpo,yxic->ypioc", S, w_hwio).reshape(3, W * C, Wu * C)
    t_edge = jnp.concatenate([T[0], T[2]], axis=1)          # even-top | odd-bot
    t_mid = jnp.concatenate([T[1] + T[2], T[0] + T[1]], axis=1)  # even-mid | odd-mid
    return jnp.stack([t_edge, t_mid], axis=0).astype(compute_dtype)


def upsample_block_forward(x_nchw, w_oihw, b, compute_dtype=jnp.float32,
                           block_batch=None):
    """Equivalent of UpSampleBlock.forward: F.interpolate(x, 2.0) -> conv3x3.

    compute_dtype=bf16 halves operand DMA bytes and uses the bf16 MXU path
    (f32 accumulation); note the *activations* are cast too, so error vs the
    f32 reference is larger than pure matmul-accumulation error.
    """
    N, C, H, W = x_nchw.shape
    Hu, Wu = 2 * H, 2 * W
    Wk = W * C               # contraction dim (no W pad)
    Wo = Wu * C              # lane-dense output width

    # NCHW -> NHWC on the *original* (small) image; pad H only (W handled in
    # the slabs); flatten (W, C) into lanes. No 4x upsampled / padded copies
    # ever hit HBM.
    x_nhwc = jnp.transpose(x_nchw, (0, 2, 3, 1))
    x_pad = jnp.pad(x_nhwc, ((0, 0), (1, 1), (0, 0), (0, 0)))
    x_in = x_pad.reshape(N, H + 2, Wk).astype(compute_dtype)

    t_all = _build_weight_slabs(w_oihw, W, compute_dtype)     # (2, Wk, 2*Wo)
    bias_row = jnp.tile(b.astype(jnp.float32), 2 * Wu).reshape(1, 2 * Wo)

    # Images per grid step: target M = B*H ~= 128 matmul rows, B | N.
    if block_batch is None:
        target = max(1, 128 // max(H, 1))
        block_batch = 1
        for cand in range(min(N, target), 0, -1):
            if N % cand == 0:
                block_batch = cand
                break
    B = block_batch
    assert N % B == 0, (N, B)
    # NOTE(v7x): with 2 TensorCores, an even grid length avoids an idle core
    # on the tail; at this demo size (grid=(1,)) it is moot.

    out_phased = pl.pallas_call(
        _upconv_kernel,
        out_shape=jax.ShapeDtypeStruct((N, 2, H, Wo), x_nchw.dtype),
        grid=(N // B,),
        in_specs=[
            pl.BlockSpec((B, H + 2, Wk), lambda n: (n, 0, 0)),
            # Constant index_map -> DMA'd once across the whole grid.
            pl.BlockSpec((2, Wk, 2 * Wo), lambda n: (0, 0, 0)),
            pl.BlockSpec((1, 2 * Wo), lambda n: (0, 0)),
        ],
        out_specs=pl.BlockSpec((B, 2, H, Wo), lambda n: (n, 0, 0, 0)),
        compiler_params=pltpu.CompilerParams(
            dimension_semantics=("parallel",)),
    )(x_in, t_all, bias_row)

    # Phased (N, 2, H, Wu*C) -> NCHW. This single fused XLA transpose is only
    # the NHWC->NCHW conversion the module contract requires; a downstream
    # NHWC consumer could take out_phased (or its (N, Hu, Wu, C) view) as-is.
    out5 = out_phased.reshape(N, 2, H, Wu, C)
    return jnp.transpose(out5, (0, 4, 2, 1, 3)).reshape(N, C, Hu, Wu)


def _reference(x_nchw, w_oihw, b):
    """Pure-JAX reference (matches PyTorch semantics)."""
    x_up = jnp.repeat(jnp.repeat(x_nchw, 2, axis=2), 2, axis=3)
    out = jax.lax.conv_general_dilated(
        x_up, w_oihw, window_strides=(1, 1), padding=((1, 1), (1, 1)),
        dimension_numbers=("NCHW", "OIHW", "NCHW"))
    return out + b.reshape(1, -1, 1, 1)


if __name__ == "__main__":
    key = jax.random.PRNGKey(0)
    k_x, k_w, k_b = jax.random.split(key, 3)

    N, C, H, W = 2, 4, 16, 16
    x = jax.random.normal(k_x, (N, C, H, W), dtype=jnp.float32)

    # Deterministic Conv2d(C, C, 3) parameter init (uniform, kaiming-style bound).
    fan_in = C * 3 * 3
    bound = 1.0 / (fan_in ** 0.5)
    w = jax.random.uniform(k_w, (C, C, 3, 3), jnp.float32, -bound, bound)
    b = jax.random.uniform(k_b, (C,), jnp.float32, -bound, bound)

    ref = _reference(x, w, b)

    # f32 path: exact (tight tolerance).
    out = jax.block_until_ready(upsample_block_forward(x, w, b))
    assert out.shape == (N, C, 2 * H, 2 * W), out.shape
    assert jnp.allclose(out, ref, atol=1e-4, rtol=1e-4), \
        float(jnp.max(jnp.abs(out - ref)))

    # bf16 MXU path (f32 accumulation, bf16 operands incl. activations):
    # looser tolerance by design.
    out_bf16 = jax.block_until_ready(
        upsample_block_forward(x, w, b, compute_dtype=jnp.bfloat16))
    assert jnp.allclose(out_bf16, ref, atol=1e-1, rtol=1e-1), \
        float(jnp.max(jnp.abs(out_bf16 - ref)))

    print("KERNEL_OK")
</pallas_src>

<mosaic_0001>
module attributes {stable_mosaic.version = 11 : i64} {
  func.func @_upconv_kernel(%arg0: i32, %arg1: memref<2x18x64xf32, #tpu.memory_space<vmem>>, %arg2: memref<2x64x256xf32, #tpu.memory_space<vmem>>, %arg3: memref<1x256xf32, #tpu.memory_space<vmem>>, %arg4: memref<2x2x16x128xf32, #tpu.memory_space<vmem>>) attributes {dimension_semantics = [#tpu.dimension_semantics<parallel>], iteration_bounds = array<i64: 1>, scalar_prefetch = 0 : i64, scratch_operands = 0 : i64, tpu.core_type = #tpu.core_type<tc>, window_params = [{transform_indices = @transform_0, window_bounds = array<i64: 2, 18, 64>}, {pipeline_mode = #tpu.pipeline_mode<synchronous>, transform_indices = @transform_1, window_bounds = array<i64: 2, 64, 256>}, {pipeline_mode = #tpu.pipeline_mode<synchronous>, transform_indices = @transform_2, window_bounds = array<i64: 1, 256>}, {transform_indices = @transform_3, window_bounds = array<i64: 2, 2, 16, 128>}]} {
    %c0 = arith.constant 0 : index
    %c0_0 = arith.constant 0 : index
    %c0_1 = arith.constant 0 : index
    %0 = vector.load %arg1[%c0, %c0_0, %c0_1] : memref<2x18x64xf32, #tpu.memory_space<vmem>>, vector<2x16x64xf32>
    %1 = vector.shape_cast %0 : vector<2x16x64xf32> to vector<32x64xf32>
    %c0_2 = arith.constant 0 : index
    %c1 = arith.constant 1 : index
    %c0_3 = arith.constant 0 : index
    %2 = vector.load %arg1[%c0_2, %c1, %c0_3] : memref<2x18x64xf32, #tpu.memory_space<vmem>>, vector<2x16x64xf32>
    %3 = vector.shape_cast %2 : vector<2x16x64xf32> to vector<32x64xf32>
    %c0_4 = arith.constant 0 : index
    %c2 = arith.constant 2 : index
    %c0_5 = arith.constant 0 : index
    %4 = vector.load %arg1[%c0_4, %c2, %c0_5] : memref<2x18x64xf32, #tpu.memory_space<vmem>>, vector<2x16x64xf32>
    %5 = vector.shape_cast %4 : vector<2x16x64xf32> to vector<32x64xf32>
    %c1_6 = arith.constant 1 : index
    %c0_7 = arith.constant 0 : index
    %c0_8 = arith.constant 0 : index
    %6 = vector.load %arg2[%c1_6, %c0_7, %c0_8] : memref<2x64x256xf32, #tpu.memory_space<vmem>>, vector<1x64x256xf32>
    %7 = vector.shape_cast %6 : vector<1x64x256xf32> to vector<64x256xf32>
    %cst = arith.constant dense<0.000000e+00> : vector<32x256xf32>
    %8 = tpu.matmul %3, %7, %cst {dimension_numbers = #tpu.dot_dimension_numbers<[1], [0], [0], [1], [0, 0, 1, 1], [], []>} : vector<32x64xf32>, vector<64x256xf32>, vector<32x256xf32> -> vector<32x256xf32>
    %c0_9 = arith.constant 0 : index
    %c0_10 = arith.constant 0 : index
    %9 = vector.load %arg3[%c0_9, %c0_10] : memref<1x256xf32, #tpu.memory_space<vmem>>, vector<1x256xf32>
    %10 = vector.broadcast %9 : vector<1x256xf32> to vector<32x256xf32>
    %11 = arith.addf %8, %10 : vector<32x256xf32>
    %c0_11 = arith.constant 0 : index
    %c0_12 = arith.constant 0 : index
    %c0_13 = arith.constant 0 : index
    %12 = vector.load %arg2[%c0_11, %c0_12, %c0_13] : memref<2x64x256xf32, #tpu.memory_space<vmem>>, vector<1x64x128xf32>
    %13 = vector.shape_cast %12 : vector<1x64x128xf32> to vector<64x128xf32>
    %cst_14 = arith.constant dense<0.000000e+00> : vector<32x128xf32>
    %14 = tpu.matmul %1, %13, %cst_14 {dimension_numbers = #tpu.dot_dimension_numbers<[1], [0], [0], [1], [0, 0, 1, 1], [], []>} : vector<32x64xf32>, vector<64x128xf32>, vector<32x128xf32> -> vector<32x128xf32>
    %15 = vector.extract_strided_slice %11 {offsets = [0, 0], sizes = [32, 128], strides = [1, 1]} : vector<32x256xf32> to vector<32x128xf32>
    %16 = arith.addf %14, %15 : vector<32x128xf32>
    %17 = vector.extract_strided_slice %11 {offsets = [0, 128], sizes = [32, 128], strides = [1, 1]} : vector<32x256xf32> to vector<32x128xf32>
    %c0_15 = arith.constant 0 : index
    %c0_16 = arith.constant 0 : index
    %c128 = arith.constant 128 : index
    %18 = vector.load %arg2[%c0_15, %c0_16, %c128] : memref<2x64x256xf32, #tpu.memory_space<vmem>>, vector<1x64x128xf32>
    %19 = vector.shape_cast %18 : vector<1x64x128xf32> to vector<64x128xf32>
    %cst_17 = arith.constant dense<0.000000e+00> : vector<32x128xf32>
    %20 = tpu.matmul %5, %19, %cst_17 {dimension_numbers = #tpu.dot_dimension_numbers<[1], [0], [0], [1], [0, 0, 1, 1], [], []>} : vector<32x64xf32>, vector<64x128xf32>, vector<32x128xf32> -> vector<32x128xf32>
    %21 = arith.addf %17, %20 : vector<32x128xf32>
    %22 = vector.shape_cast %16 : vector<32x128xf32> to vector<2x16x128xf32>
    %c0_18 = arith.constant 0 : index
    %c0_19 = arith.constant 0 : index
    %c0_20 = arith.constant 0 : index
    %c0_21 = arith.constant 0 : index
    %23 = vector.load %arg4[%c0_18, %c0_19, %c0_20, %c0_21] : memref<2x2x16x128xf32, #tpu.memory_space<vmem>>, vector<2x1x16x128xf32>
    %24 = vector.shape_cast %23 : vector<2x1x16x128xf32> to vector<2x16x128xf32>
    %25 = vector.shape_cast %22 : vector<2x16x128xf32> to vector<2x1x16x128xf32>
    tpu.vector_store %arg4[%c0_18, %c0_19, %c0_20, %c0_21], %25 {strides = array<i32>} : memref<2x2x16x128xf32, #tpu.memory_space<vmem>>, vector<2x1x16x128xf32>,
    %26 = vector.shape_cast %21 : vector<32x128xf32> to vector<2x16x128xf32>
    %c0_22 = arith.constant 0 : index
    %c1_23 = arith.constant 1 : index
    %c0_24 = arith.constant 0 : index
    %c0_25 = arith.constant 0 : index
    %27 = vector.load %arg4[%c0_22, %c1_23, %c0_24, %c0_25] : memref<2x2x16x128xf32, #tpu.memory_space<vmem>>, vector<2x1x16x128xf32>
    %28 = vector.shape_cast %27 : vector<2x1x16x128xf32> to vector<2x16x128xf32>
    %29 = vector.shape_cast %26 : vector<2x16x128xf32> to vector<2x1x16x128xf32>
    tpu.vector_store %arg4[%c0_22, %c1_23, %c0_24, %c0_25], %29 {strides = array<i32>} : memref<2x2x16x128xf32, #tpu.memory_space<vmem>>, vector<2x1x16x128xf32>,
    return
  }
  func.func @transform_0(%arg0: i32) -> (i32, i32, i32) {
    %c0_i32 = arith.constant 0 : i32
    %c0_i32_0 = arith.constant 0 : i32
    %c0_i32_1 = arith.constant 0 : i32
    return %arg0, %c0_i32, %c0_i32_0 : i32, i32, i32
  }
  func.func @transform_1(%arg0: i32) -> (i32, i32, i32) {
    %c0_i32 = arith.constant 0 : i32
    %c0_i32_0 = arith.constant 0 : i32
    %c0_i32_1 = arith.constant 0 : i32
    %c0_i32_2 = arith.constant 0 : i32
    return %c0_i32, %c0_i32_0, %c0_i32_1 : i32, i32, i32
  }
  func.func @transform_2(%arg0: i32) -> (i32, i32) {
    %c0_i32 = arith.constant 0 : i32
    %c0_i32_0 = arith.constant 0 : i32
    %c0_i32_1 = arith.constant 0 : i32
    return %c0_i32, %c0_i32_0 : i32, i32
  }
  func.func @transform_3(%arg0: i32) -> (i32, i32, i32, i32) {
    %c0_i32 = arith.constant 0 : i32
    %c0_i32_0 = arith.constant 0 : i32
    %c0_i32_1 = arith.constant 0 : i32
    %c0_i32_2 = arith.constant 0 : i32
    return %arg0, %c0_i32, %c0_i32_0, %c0_i32_1 : i32, i32, i32, i32
  }
}

</mosaic_0001>

<llo_original>
// kernel: tpu_custom_call.1
$region0: #{tpu_custom_call.1}
  #allocation0 [shape = 'u32[]', space=smem, size = 0x4, offset = 0x4, fixed_abs, tag = 'smem constant byte address 0x4 - core index']
  #allocation1 [shape = 'u32[144,128]{1,0:T(1,128)}', space=vmem, size = 0x12000, scoped, tag = 'internal scratch']
  %s0 = inlined_call_operand.vmem [shape: f32[2,18,64], index: 0, kind: input, shape index: {}]
  %s1 = inlined_call_operand.hbm [shape: f32[2,64,256], index: 1, kind: input, shape index: {}]
  %s2 = inlined_call_operand.vmem [shape: f32[1,256], index: 2, kind: input, shape index: {}]
  %s3 = inlined_call_operand.hbm [shape: f32[2,2,16,128], index: 3, kind: output, shape index: {}]
  %s4 = sld [smem:[#allocation0]]
  $region26: #{tpu_custom_call.1} parent=0
    _
  %s6 = ssub.s32 1, %s4
  %s7 = scalar_select 0, %s6, %s4
  $region1: #{tpu_custom_call.1} parent=0
    #allocation2 [shape = 'u8[131072]{0}', space=vmem, size = 0x20000, scoped, tag = 'input window, operand 1, single buffered']
    #allocation3 [shape = 's32[1]{0}', space=sflag, size = 0x4, scoped, tag = 'scoped memory for tpu_custom_call.1']
    #allocation4 [shape = 's32[1]{0}', space=sflag, size = 0x4, scoped, tag = 'scoped memory for tpu_custom_call.1']
    #allocation5 [shape = 'u8[32768]{0}', space=vmem, size = 0x8000, scoped, tag = 'output window, operand 0, single buffered']
    %8 = vsyncpa [#allocation3], 0
    %9 = vsyncpa [#allocation4], 0
    // Predicated region
    $region2: #{tpu_custom_call.1} parent=1 // pred_check
      _
    $region3: #{tpu_custom_call.1} parent=1 // pred_check_branch
      %11 = sbr.rel (0) target = $region5
    $region4: #{tpu_custom_call.1} parent=1 // pred_region
      _
    $region5: #{tpu_custom_call.1} parent=1 // pred_fallthru
      _
    // Predicated region
    $region6: #{tpu_custom_call.1} parent=1 // pred_check
      _
    $region7: #{tpu_custom_call.1} parent=1 // pred_check_branch
      %13 = sbr.rel (0) target = $region9
    $region8: #{tpu_custom_call.1} parent=1 // pred_region
      %s15 = ssub.s32 4096, 4096
      %16 = vsyncadd [#allocation3], %s15
      %s17 = sshll.u32 [#allocation2], 4
      %s18 = int_to_ptr.vmem [resolvable:$true] %s17
      %23 = dma.hbm_to_vmem [thread:$0]  %s1, 4096, %s18, [#allocation3], 256, 256, 16
    $region9: #{tpu_custom_call.1} parent=1 // pred_fallthru
      _
    // Predicated region
    $region10: #{tpu_custom_call.1} parent=1 // pred_check
      _
    $region11: #{tpu_custom_call.1} parent=1 // pred_check_branch
      %25 = sbr.rel (0) target = $region13
    $region12: #{tpu_custom_call.1} parent=1 // pred_region
      _
    $region13: #{tpu_custom_call.1} parent=1 // pred_fallthru
      _
    // Predicated region
    $region14: #{tpu_custom_call.1} parent=1 // pred_check
      _
    $region15: #{tpu_custom_call.1} parent=1 // pred_check_branch
      %27 = sbr.rel (0) target = $region17
    $region16: #{tpu_custom_call.1} parent=1 // pred_region
      %28 = dma.done [#allocation3], 4096
    $region17: #{tpu_custom_call.1} parent=1 // pred_fallthru
      _
    %v29 = vld [vmem:[%s0] sm:$0xff]
    %v30 = vld [vmem:[%s0 + $0x8] sm:$0xff]
    %v31 = vld [vmem:[%s0 + $0x18] sm:$0xff]
    %v32 = vld [vmem:[%s0 + $0x20] sm:$0xff]
    %v33 = vld [vmem:[%s0 + $0x1] sm:$0xff]
    %v34 = vld [vmem:[%s0 + $0x9] sm:$0xff]
    %v35 = vld [vmem:[%s0 + $0x19] sm:$0xff]
    %v36 = vld [vmem:[%s0 + $0x21] sm:$0xff]
    %v37 = vld [vmem:[%s0 + $0x2] sm:$0xff]
    %v38 = vld [vmem:[%s0 + $0xa] sm:$0xff]
    %v39 = vld [vmem:[%s0 + $0x1a] sm:$0xff]
    %v40 = vld [vmem:[%s0 + $0x22] sm:$0xff]
    %s41 = scalar_lea.vmem [#allocation2], 128
    %v42 = vld [vmem:[%s41] sm:$0xff]
    %v43 = vld [vmem:[%s41 + $0x8] sm:$0xff]
    %v44 = vld [vmem:[%s41 + $0x10] sm:$0xff]
    %v45 = vld [vmem:[%s41 + $0x18] sm:$0xff]
    %v46 = vld [vmem:[%s41 + $0x20] sm:$0xff]
    %v47 = vld [vmem:[%s41 + $0x28] sm:$0xff]
    %v48 = vld [vmem:[%s41 + $0x30] sm:$0xff]
    %v49 = vld [vmem:[%s41 + $0x38] sm:$0xff]
    %v50 = vld [vmem:[%s41 + $0x40] sm:$0xff]
    %v51 = vld [vmem:[%s41 + $0x48] sm:$0xff]
    %v52 = vld [vmem:[%s41 + $0x50] sm:$0xff]
    %v53 = vld [vmem:[%s41 + $0x58] sm:$0xff]
    %v54 = vld [vmem:[%s41 + $0x60] sm:$0xff]
    %v55 = vld [vmem:[%s41 + $0x68] sm:$0xff]
    %v56 = vld [vmem:[%s41 + $0x70] sm:$0xff]
    %v57 = vld [vmem:[%s41 + $0x78] sm:$0xff]
    %v58 = vld [vmem:[%s2] sm:$0x3]
    %v60 = vlaneseq
    %v61 = vshrl.u32 %v60, 7
    %v62 = vsub.s32 0, %v61
    %v63 = vrot.slane %v58, %v62
    %v64 = vlaneseq
    %v65 = vshrl.u32 %v64, 7
    %v66 = vsub.s32 1, %v65
    %v67 = vrot.slane %v58, %v66
    %vm70 = vcmask 523264
    %v72 = vsel %vm70, %v33, 0
    %v75 = vsel %vm70, %v34, 0
    %v78 = vsel %vm70, %v35, 0
    %v81 = vsel %vm70, %v36, 0
    %83 = vmatprep.subr.mxu0 %v43
    %84 = vmatpush1.msra.mxu0 %v42
    %85 = vmatprep.subr.mxu0 %v45
    %86 = vmatpush1.msra.mxu0 %v44
    %87 = vmatprep.subr.mxu0 %v47
    %88 = vmatpush1.msra.mxu0 %v46
    %89 = vmatprep.subr.mxu0 %v49
    %90 = vmatpush1.msra.mxu0 %v48
    %91 = vmatprep.subr.mxu0 %v51
    %92 = vmatpush1.msra.mxu0 %v50
    %93 = vmatprep.subr.mxu0 %v53
    %94 = vmatpush1.msra.mxu0 %v52
    %95 = vmatprep.subr.mxu0 %v55
    %96 = vmatpush1.msra.mxu0 %v54
    %97 = vmatprep.subr.mxu0 %v57
    %98 = vmatpush1.msra.mxu0 %v56
    %99 = vmatprep.subr.mxu0 0.0
    %100 = vmatpush1.msra.mxu0 0.0
    %101 = vmatprep.subr.mxu0 0.0
    %102 = vmatpush1.msra.mxu0 0.0
    %103 = vmatprep.subr.mxu0 0.0
    %104 = vmatpush1.msra.mxu0 0.0
    %105 = vmatprep.subr.mxu0 0.0
    %106 = vmatpush1.msra.mxu0 0.0
    %107 = vmatprep.subr.mxu0 0.0
    %108 = vmatpush1.msra.mxu0 0.0
    %109 = vmatprep.subr.mxu0 0.0
    %110 = vmatpush1.msra.mxu0 0.0
    %111 = vmatprep.subr.mxu0 0.0
    %112 = vmatpush1.msra.mxu0 0.0
    %113 = vmatprep.subr.mxu0 0.0
    %114 = vmatpush1.msra.mxu0 0.0
    %115 = vmatprep.subr.mxu0 0.0
    %116 = vmatpush1.msra.mxu0 0.0
    %117 = vmatprep.subr.mxu0 0.0
    %118 = vmatpush1.msra.mxu0 0.0
    %119 = vmatprep.subr.mxu0 0.0
    %120 = vmatpush1.msra.mxu0 0.0
    %121 = vmatprep.subr.mxu0 0.0
    %122 = vmatpush1.msra.mxu0 0.0
    %123 = vmatprep.subr.mxu0 0.0
    %124 = vmatpush1.msra.mxu0 0.0
    %125 = vmatprep.subr.mxu0 0.0
    %126 = vmatpush1.msra.mxu0 0.0
    %127 = vmatprep.subr.mxu0 0.0
    %128 = vmatpush1.msra.mxu0 0.0
    %129 = vmatprep.subr.mxu0 0.0
    %130 = vmatpush1.msra.mxu0 0.0
    %131 = vmatprep.subr.mxu0 0.0
    %132 = vmatpush1.msra.mxu0 0.0
    %133 = vmatprep.subr.mxu0 0.0
    %134 = vmatpush1.msra.mxu0 0.0
    %135 = vmatprep.subr.mxu0 0.0
    %136 = vmatpush1.msra.mxu0 0.0
    %137 = vmatprep.subr.mxu0 0.0
    %138 = vmatpush1.msra.mxu0 0.0
    %139 = vmatprep.subr.mxu0 0.0
    %140 = vmatpush1.msra.mxu0 0.0
    %141 = vmatprep.subr.mxu0 0.0
    %142 = vmatpush1.msra.mxu0 0.0
    %143 = vmatprep.subr.mxu0 0.0
    %144 = vmatpush1.msra.mxu0 0.0
    %145 = vmatprep.subr.mxu0 0.0
    %146 = vmatpush1.msra.mxu0 0.0
    %147 = vmatprep.mubr.f32.mxu0 0.0
    %148 = vmatmul.mubr.f32.gmra.mrb[0].mxu0 %v72
    %v149 = vpop.f32.mrb[0].mxu0
    %v150 = vadd.f32 %v63, %v149
    %v151 = vpop.f32.mrb[0].mxu0
    %v152 = vadd.f32 %v67, %v151
    %153 = vmatprep.mubr.f32.mxu0 0.0
    %154 = vmatmul.mubr.f32.gmra.mrb[0].mxu0 %v75
    %v155 = vpop.f32.mrb[0].mxu0
    %v156 = vadd.f32 %v63, %v155
    %v157 = vpop.f32.mrb[0].mxu0
    %v158 = vadd.f32 %v67, %v157
    %159 = vmatprep.mubr.f32.mxu0 0.0
    %160 = vmatmul.mubr.f32.gmra.mrb[0].mxu0 %v78
    %v161 = vpop.f32.mrb[0].mxu0
    %v162 = vadd.f32 %v63, %v161
    %v163 = vpop.f32.mrb[0].mxu0
    %v164 = vadd.f32 %v67, %v163
    %165 = vmatprep.mubr.f32.mxu0 0.0
    %166 = vmatmul.mubr.f32.gmra.mrb[0].mxu0 %v81
    %v167 = vpop.f32.mrb[0].mxu0
    %v168 = vadd.f32 %v63, %v167
    %v169 = vpop.f32.mrb[0].mxu0
    %v170 = vadd.f32 %v67, %v169
    %171 = vdwg.mxu0
    %v172 = vld [vmem:[#allocation2] sm:$0xff]
    %v173 = vld [vmem:[#allocation2 + $0x10] sm:$0xff]
    %v174 = vld [vmem:[#allocation2 + $0x20] sm:$0xff]
    %v175 = vld [vmem:[#allocation2 + $0x30] sm:$0xff]
    %v176 = vld [vmem:[#allocation2 + $0x40] sm:$0xff]
    %v177 = vld [vmem:[#allocation2 + $0x50] sm:$0xff]
    %v178 = vld [vmem:[#allocation2 + $0x60] sm:$0xff]
    %v179 = vld [vmem:[#allocation2 + $0x70] sm:$0xff]
    %v181 = vsel %vm70, %v29, 0
    %v184 = vsel %vm70, %v30, 0
    %v187 = vsel %vm70, %v31, 0
    %v190 = vsel %vm70, %v32, 0
    %192 = vmatprep.subr.mxu0 0.0
    %193 = vmatpush1.msra.mxu0 %v172
    %194 = vmatprep.subr.mxu0 0.0
    %195 = vmatpush1.msra.mxu0 %v173
    %196 = vmatprep.subr.mxu0 0.0
    %197 = vmatpush1.msra.mxu0 %v174
    %198 = vmatprep.subr.mxu0 0.0
    %199 = vmatpush1.msra.mxu0 %v175
    %200 = vmatprep.subr.mxu0 0.0
    %201 = vmatpush1.msra.mxu0 %v176
    %202 = vmatprep.subr.mxu0 0.0
    %203 = vmatpush1.msra.mxu0 %v177
    %204 = vmatprep.subr.mxu0 0.0
    %205 = vmatpush1.msra.mxu0 %v178
    %206 = vmatprep.subr.mxu0 0.0
    %207 = vmatpush1.msra.mxu0 %v179
    %208 = vmatprep.subr.mxu0 0.0
    %209 = vmatpush1.msra.mxu0 0.0
    %210 = vmatprep.subr.mxu0 0.0
    %211 = vmatpush1.msra.mxu0 0.0
    %212 = vmatprep.subr.mxu0 0.0
    %213 = vmatpush1.msra.mxu0 0.0
    %214 = vmatprep.subr.mxu0 0.0
    %215 = vmatpush1.msra.mxu0 0.0
    %216 = vmatprep.subr.mxu0 0.0
    %217 = vmatpush1.msra.mxu0 0.0
    %218 = vmatprep.subr.mxu0 0.0
    %219 = vmatpush1.msra.mxu0 0.0
    %220 = vmatprep.subr.mxu0 0.0
    %221 = vmatpush1.msra.mxu0 0.0
    %222 = vmatprep.subr.mxu0 0.0
    %223 = vmatpush1.msra.mxu0 0.0
    %224 = vmatprep.subr.mxu0 0.0
    %225 = vmatpush1.msra.mxu0 0.0
    %226 = vmatprep.subr.mxu0 0.0
    %227 = vmatpush1.msra.mxu0 0.0
    %228 = vmatprep.subr.mxu0 0.0
    %229 = vmatpush1.msra.mxu0 0.0
    %230 = vmatprep.subr.mxu0 0.0
    %231 = vmatpush1.msra.mxu0 0.0
    %232 = vmatprep.subr.mxu0 0.0
    %233 = vmatpush1.msra.mxu0 0.0
    %234 = vmatprep.subr.mxu0 0.0
    %235 = vmatpush1.msra.mxu0 0.0
    %236 = vmatprep.subr.mxu0 0.0
    %237 = vmatpush1.msra.mxu0 0.0
    %238 = vmatprep.subr.mxu0 0.0
    %239 = vmatpush1.msra.mxu0 0.0
    %240 = vmatprep.subr.mxu0 0.0
    %241 = vmatpush1.msra.mxu0 0.0
    %242 = vmatprep.subr.mxu0 0.0
    %243 = vmatpush1.msra.mxu0 0.0
    %244 = vmatprep.subr.mxu0 0.0
    %245 = vmatpush1.msra.mxu0 0.0
    %246 = vmatprep.subr.mxu0 0.0
    %247 = vmatpush1.msra.mxu0 0.0
    %248 = vmatprep.subr.mxu0 0.0
    %249 = vmatpush1.msra.mxu0 0.0
    %250 = vmatprep.subr.mxu0 0.0
    %251 = vmatpush1.msra.mxu0 0.0
    %252 = vmatprep.subr.mxu0 0.0
    %253 = vmatpush1.msra.mxu0 0.0
    %254 = vmatprep.subr.mxu0 0.0
    %255 = vmatpush1.msra.mxu0 0.0
    %256 = vmatprep.mubr.f32.mxu0 0.0
    %257 = vmatmul.mubr.f32.gmra.mrb[0].mxu0 %v181
    %v258 = vpop.f32.mrb[0].mxu0
    %v259 = vadd.f32 %v150, %v258
    %v260 = vpop.f32.mrb[0].mxu0
    %261 = vmatprep.mubr.f32.mxu0 0.0
    %262 = vmatmul.mubr.f32.gmra.mrb[0].mxu0 %v184
    %v263 = vpop.f32.mrb[0].mxu0
    %v264 = vadd.f32 %v156, %v263
    %v265 = vpop.f32.mrb[0].mxu0
    %266 = vmatprep.mubr.f32.mxu0 0.0
    %267 = vmatmul.mubr.f32.gmra.mrb[0].mxu0 %v187
    %v268 = vpop.f32.mrb[0].mxu0
    %v269 = vadd.f32 %v162, %v268
    %v270 = vpop.f32.mrb[0].mxu0
    %271 = vmatprep.mubr.f32.mxu0 0.0
    %272 = vmatmul.mubr.f32.gmra.mrb[0].mxu0 %v190
    %v273 = vpop.f32.mrb[0].mxu0
    %v274 = vadd.f32 %v168, %v273
    %v275 = vpop.f32.mrb[0].mxu0
    %276 = vdwg.mxu0
    %v277 = vld [vmem:[#allocation2 + $0x8] sm:$0xff]
    %v278 = vld [vmem:[#allocation2 + $0x18] sm:$0xff]
    %v279 = vld [vmem:[#allocation2 + $0x28] sm:$0xff]
    %v280 = vld [vmem:[#allocation2 + $0x38] sm:$0xff]
    %v281 = vld [vmem:[#allocation2 + $0x48] sm:$0xff]
    %v282 = vld [vmem:[#allocation2 + $0x58] sm:$0xff]
    %v283 = vld [vmem:[#allocation2 + $0x68] sm:$0xff]
    %v284 = vld [vmem:[#allocation2 + $0x78] sm:$0xff]
    %v286 = vsel %vm70, %v37, 0
    %v289 = vsel %vm70, %v38, 0
    %v292 = vsel %vm70, %v39, 0
    %v295 = vsel %vm70, %v40, 0
    %297 = vmatprep.subr.mxu0 0.0
    %298 = vmatpush1.msra.mxu0 %v277
    %299 = vmatprep.subr.mxu0 0.0
    %300 = vmatpush1.msra.mxu0 %v278
    %301 = vmatprep.subr.mxu0 0.0
    %302 = vmatpush1.msra.mxu0 %v279
    %303 = vmatprep.subr.mxu0 0.0
    %304 = vmatpush1.msra.mxu0 %v280
    %305 = vmatprep.subr.mxu0 0.0
    %306 = vmatpush1.msra.mxu0 %v281
    %307 = vmatprep.subr.mxu0 0.0
    %308 = vmatpush1.msra.mxu0 %v282
    %309 = vmatprep.subr.mxu0 0.0
    %310 = vmatpush1.msra.mxu0 %v283
    %311 = vmatprep.subr.mxu0 0.0
    %312 = vmatpush1.msra.mxu0 %v284
    %313 = vmatprep.subr.mxu0 0.0
    %314 = vmatpush1.msra.mxu0 0.0
    %315 = vmatprep.subr.mxu0 0.0
    %316 = vmatpush1.msra.mxu0 0.0
    %317 = vmatprep.subr.mxu0 0.0
    %318 = vmatpush1.msra.mxu0 0.0
    %319 = vmatprep.subr.mxu0 0.0
    %320 = vmatpush1.msra.mxu0 0.0
    %321 = vmatprep.subr.mxu0 0.0
    %322 = vmatpush1.msra.mxu0 0.0
    %323 = vmatprep.subr.mxu0 0.0
    %324 = vmatpush1.msra.mxu0 0.0
    %325 = vmatprep.subr.mxu0 0.0
    %326 = vmatpush1.msra.mxu0 0.0
    %327 = vmatprep.subr.mxu0 0.0
    %328 = vmatpush1.msra.mxu0 0.0
    %329 = vmatprep.subr.mxu0 0.0
    %330 = vmatpush1.msra.mxu0 0.0
    %331 = vmatprep.subr.mxu0 0.0
    %332 = vmatpush1.msra.mxu0 0.0
    %333 = vmatprep.subr.mxu0 0.0
    %334 = vmatpush1.msra.mxu0 0.0
    %335 = vmatprep.subr.mxu0 0.0
    %336 = vmatpush1.msra.mxu0 0.0
    %337 = vmatprep.subr.mxu0 0.0
    %338 = vmatpush1.msra.mxu0 0.0
    %339 = vmatprep.subr.mxu0 0.0
    %340 = vmatpush1.msra.mxu0 0.0
    %341 = vmatprep.subr.mxu0 0.0
    %342 = vmatpush1.msra.mxu0 0.0
    %343 = vmatprep.subr.mxu0 0.0
    %344 = vmatpush1.msra.mxu0 0.0
    %345 = vmatprep.subr.mxu0 0.0
    %346 = vmatpush1.msra.mxu0 0.0
    %347 = vmatprep.subr.mxu0 0.0
    %348 = vmatpush1.msra.mxu0 0.0
    %349 = vmatprep.subr.mxu0 0.0
    %350 = vmatpush1.msra.mxu0 0.0
    %351 = vmatprep.subr.mxu0 0.0
    %352 = vmatpush1.msra.mxu0 0.0
    %353 = vmatprep.subr.mxu0 0.0
    %354 = vmatpush1.msra.mxu0 0.0
    %355 = vmatprep.subr.mxu0 0.0
    %356 = vmatpush1.msra.mxu0 0.0
    %357 = vmatprep.subr.mxu0 0.0
    %358 = vmatpush1.msra.mxu0 0.0
    %359 = vmatprep.subr.mxu0 0.0
    %360 = vmatpush1.msra.mxu0 0.0
    %361 = vmatprep.mubr.f32.mxu0 0.0
    %362 = vmatmul.mubr.f32.gmra.mrb[0].mxu0 %v286
    %v363 = vpop.f32.mrb[0].mxu0
    %v364 = vadd.f32 0.0, %v363
    %v365 = vpop.f32.mrb[0].mxu0
    %366 = vmatprep.mubr.f32.mxu0 0.0
    %367 = vmatmul.mubr.f32.gmra.mrb[0].mxu0 %v289
    %v368 = vpop.f32.mrb[0].mxu0
    %v369 = vadd.f32 0.0, %v368
    %v370 = vpop.f32.mrb[0].mxu0
    %371 = vmatprep.mubr.f32.mxu0 0.0
    %372 = vmatmul.mubr.f32.gmra.mrb[0].mxu0 %v292
    %v373 = vpop.f32.mrb[0].mxu0
    %v374 = vadd.f32 0.0, %v373
    %v375 = vpop.f32.mrb[0].mxu0
    %376 = vmatprep.mubr.f32.mxu0 0.0
    %377 = vmatmul.mubr.f32.gmra.mrb[0].mxu0 %v295
    %v378 = vpop.f32.mrb[0].mxu0
    %v379 = vadd.f32 0.0, %v378
    %v380 = vpop.f32.mrb[0].mxu0
    %381 = vdwg.mxu0
    %v382 = vadd.f32 %v152, %v364
    %v383 = vadd.f32 %v158, %v369
    %v384 = vadd.f32 %v164, %v374
    %v385 = vadd.f32 %v170, %v379
    %386 = vst [vmem:[#allocation5] sm:$0xff] %v259
    %387 = vst [vmem:[#allocation5 + $0x8] sm:$0xff] %v264
    %388 = vst [vmem:[#allocation5 + $0x20] sm:$0xff] %v269
    %389 = vst [vmem:[#allocation5 + $0x28] sm:$0xff] %v274
    %s390 = scalar_lea.vmem [#allocation5], 16
    %391 = vst [vmem:[%s390] sm:$0xff] %v382
    %392 = vst [vmem:[%s390 + $0x8] sm:$0xff] %v383
    %393 = vst [vmem:[%s390 + $0x20] sm:$0xff] %v384
    %394 = vst [vmem:[%s390 + $0x28] sm:$0xff] %v385
    // Predicated region
    $region18: #{tpu_custom_call.1} parent=1 // pred_check
      _
    $region19: #{tpu_custom_call.1} parent=1 // pred_check_branch
      %396 = sbr.rel (0) target = $region21
    $region20: #{tpu_custom_call.1} parent=1 // pred_region
      %s398 = ssub.s32 1024, 1024
      %399 = vsyncadd [#allocation4], %s398
      %s400 = sshll.u32 [#allocation5], 4
      %s401 = int_to_ptr.vmem [resolvable:$true] %s400
      %406 = dma.vmem_to_hbm [thread:$0]  %s401, 1024, %s3, [#allocation4], 128, 128, 8
    $region21: #{tpu_custom_call.1} parent=1 // pred_fallthru
      _
    // Predicated region
    $region22: #{tpu_custom_call.1} parent=1 // pred_check
      _
    $region23: #{tpu_custom_call.1} parent=1 // pred_check_branch
      %408 = sbr.rel (0) target = $region25
    $region24: #{tpu_custom_call.1} parent=1 // pred_region
      %409 = dma.done [#allocation4], 1024
    $region25: #{tpu_custom_call.1} parent=1 // pred_fallthru
      _
    %410 = vsyncpa [#allocation3], 1
    %411 = vsyncpa [#allocation4], 1

</llo_original>
